<compile_context>
chip_gen: v7x
topology: tpu7x:2x2x1
jax: 0.10.0
libtpu: 0.0.40
codegen_flags: <defaults>
</compile_context>

<pallas_src>
import jax
import jax.numpy as jnp
from jax.experimental import pallas as pl
from jax.experimental.pallas import tpu as pltpu


def _normalize_kernel(x_ref, scale_ref, bias_ref, o_ref):
    # x_ref/o_ref:          (TR, THW) VMEM tile of the (N*C, H*W) view
    # scale_ref/bias_ref:   (TR, 1)   per-row stats, broadcast across lanes
    o_ref[...] = (x_ref[...] * scale_ref[...] + bias_ref[...]).astype(o_ref.dtype)


def _choose_tiles(n_rows: int, hw: int, itemsize: int):
    """Pick (row_tile, lane_tile) so each x block is ~4 MiB (HBM-roofline
    sweet spot), the lane tile is a multiple of 128 (or the full H*W), and the
    row tile is a multiple of the dtype-aware sublane packing (or full N*C)."""
    sub = max(8, 32 // max(1, itemsize))          # 8 f32 / 16 bf16 / 32 int8
    target_bytes = 4 * 1024 * 1024                # per x block
    target_elems = max(1, target_bytes // itemsize)

    # Lane (H*W) tile: full row if it fits the target, else a 128-multiple.
    if hw * itemsize <= target_bytes:
        thw = hw
    else:
        thw = max(128, (target_elems // sub) // 128 * 128)
        thw = min(thw, max(128, (hw // 128) * 128))

    # Row tile: enough rows to reach the target, multiple of `sub` unless it
    # covers the whole row extent (full extent has no divisibility constraint).
    rows_for_target = max(1, target_elems // thw)
    if rows_for_target >= n_rows:
        tr = n_rows
    else:
        tr = min(n_rows, max(sub, (rows_for_target // sub) * sub))
    return tr, thw


def normalize(x: jax.Array, mean: jax.Array, std: jax.Array, out_dtype=None) -> jax.Array:
    """x: (N, C, H, W); mean/std: (C,). Returns (x - mean) / std per channel."""
    N, C, H, W = x.shape
    assert mean.shape == (C,) and std.shape == (C,)
    out_dtype = x.dtype if out_dtype is None else jnp.dtype(out_dtype)
    # TODO(synk): if the consumer (first conv) runs in bf16, pass out_dtype=bf16
    # or fuse this normalize into the input pipeline to halve the write stream.

    R = N * C                # rows of the flattened view, one per (image, channel)
    HW = H * W
    itemsize = x.dtype.itemsize

    # Fold the divide into a multiply-add, expanded to tiny per-row operands.
    scale = (1.0 / std).astype(x.dtype)          # (C,)
    bias = (-mean / std).astype(x.dtype)         # (C,)
    scale_rows = jnp.tile(scale, N).reshape(R, 1)   # row r -> channel r % C
    bias_rows = jnp.tile(bias, N).reshape(R, 1)

    x2 = x.reshape(R, HW)    # contiguous, lane-dense view of NCHW

    tr, thw = _choose_tiles(R, HW, itemsize)
    grid = (pl.cdiv(R, tr), pl.cdiv(HW, thw))    # trailing partials masked by Pallas

    # Scoped-VMEM budget from the actual footprint: double-buffered in + out
    # blocks plus the tiny per-row stat blocks, with headroom for the compiler.
    block_bytes = tr * thw * itemsize
    vmem_needed = 4 * block_bytes + 8 * tr * itemsize + (2 << 20)
    vmem_limit = int(min(48 * 1024 * 1024, max(vmem_needed, 4 * 1024 * 1024)))

    out2 = pl.pallas_call(
        _normalize_kernel,
        out_shape=jax.ShapeDtypeStruct((R, HW), out_dtype),
        grid=grid,
        in_specs=[
            pl.BlockSpec((tr, thw), lambda i, j: (i, j)),   # x tile
            pl.BlockSpec((tr, 1), lambda i, j: (i, 0)),     # per-row scale
            pl.BlockSpec((tr, 1), lambda i, j: (i, 0)),     # per-row bias
        ],
        out_specs=pl.BlockSpec((tr, thw), lambda i, j: (i, j)),
        compiler_params=pltpu.CompilerParams(
            dimension_semantics=("parallel", "parallel"),
            vmem_limit_bytes=vmem_limit,
        ),
    )(x2, scale_rows, bias_rows)

    return out2.reshape(N, C, H, W)


if __name__ == "__main__":
    # Deterministic "buffers" (SVHN-style per-channel stats, set in-script).
    mean = jnp.array([0.4377, 0.4438, 0.4728], dtype=jnp.float32)
    std = jnp.array([0.1980, 0.2010, 0.1970], dtype=jnp.float32)

    # Small NCHW input consistent with the 3-channel module.
    key = jax.random.PRNGKey(0)
    x = jax.random.uniform(key, (2, 3, 16, 16), dtype=jnp.float32)

    out = normalize(x, mean, std)
    out = jax.block_until_ready(out)

    # Reference check in plain JAX (computed the PyTorch way).
    ref = (x - mean.reshape(1, 3, 1, 1)) / std.reshape(1, 3, 1, 1)
    assert out.shape == ref.shape and out.dtype == ref.dtype
    # x*(1/std) + (-mean/std) differs from (x-mean)/std by <= a few ulp.
    assert jnp.allclose(out, ref, atol=1e-5, rtol=1e-5)

    print("KERNEL_OK")
</pallas_src>

<mosaic_0001>
module attributes {stable_mosaic.version = 11 : i64} {
  func.func @_normalize_kernel(%arg0: i32, %arg1: i32, %arg2: memref<6x256xf32, #tpu.memory_space<vmem>>, %arg3: memref<6x1xf32, #tpu.memory_space<vmem>>, %arg4: memref<6x1xf32, #tpu.memory_space<vmem>>, %arg5: memref<6x256xf32, #tpu.memory_space<vmem>>) attributes {dimension_semantics = [#tpu.dimension_semantics<parallel>, #tpu.dimension_semantics<parallel>], iteration_bounds = array<i64: 1, 1>, scalar_prefetch = 0 : i64, scratch_operands = 0 : i64, tpu.core_type = #tpu.core_type<tc>, window_params = [{transform_indices = @transform_0, window_bounds = array<i64: 6, 256>}, {transform_indices = @transform_1, window_bounds = array<i64: 6, 1>}, {transform_indices = @transform_2, window_bounds = array<i64: 6, 1>}, {transform_indices = @transform_3, window_bounds = array<i64: 6, 256>}]} {
    %c0 = arith.constant 0 : index
    %c0_0 = arith.constant 0 : index
    %0 = vector.load %arg2[%c0, %c0_0] : memref<6x256xf32, #tpu.memory_space<vmem>>, vector<6x256xf32>
    %c0_1 = arith.constant 0 : index
    %c0_2 = arith.constant 0 : index
    %1 = vector.load %arg3[%c0_1, %c0_2] : memref<6x1xf32, #tpu.memory_space<vmem>>, vector<6x1xf32>
    %2 = vector.broadcast %1 : vector<6x1xf32> to vector<6x256xf32>
    %3 = arith.mulf %0, %2 : vector<6x256xf32>
    %c0_3 = arith.constant 0 : index
    %c0_4 = arith.constant 0 : index
    %4 = vector.load %arg4[%c0_3, %c0_4] : memref<6x1xf32, #tpu.memory_space<vmem>>, vector<6x1xf32>
    %5 = vector.broadcast %4 : vector<6x1xf32> to vector<6x256xf32>
    %6 = arith.addf %3, %5 : vector<6x256xf32>
    %c0_5 = arith.constant 0 : index
    %c0_6 = arith.constant 0 : index
    %7 = vector.load %arg5[%c0_5, %c0_6] : memref<6x256xf32, #tpu.memory_space<vmem>>, vector<6x256xf32>
    tpu.vector_store %arg5[%c0_5, %c0_6], %6 {strides = array<i32>} : memref<6x256xf32, #tpu.memory_space<vmem>>, vector<6x256xf32>,
    return
  }
  func.func @transform_0(%arg0: i32, %arg1: i32) -> (i32, i32) {
    %c0_i32 = arith.constant 0 : i32
    return %arg0, %arg1 : i32, i32
  }
  func.func @transform_1(%arg0: i32, %arg1: i32) -> (i32, i32) {
    %c0_i32 = arith.constant 0 : i32
    %c0_i32_0 = arith.constant 0 : i32
    return %arg0, %c0_i32 : i32, i32
  }
  func.func @transform_2(%arg0: i32, %arg1: i32) -> (i32, i32) {
    %c0_i32 = arith.constant 0 : i32
    %c0_i32_0 = arith.constant 0 : i32
    return %arg0, %c0_i32 : i32, i32
  }
  func.func @transform_3(%arg0: i32, %arg1: i32) -> (i32, i32) {
    %c0_i32 = arith.constant 0 : i32
    return %arg0, %arg1 : i32, i32
  }
}

</mosaic_0001>

<llo_original>
// kernel: tpu_custom_call.1
$region0: #{tpu_custom_call.1}
  #allocation0 [shape = 'u32[]', space=smem, size = 0x4, offset = 0x4, fixed_abs, tag = 'smem constant byte address 0x4 - core index']
  #allocation1 [shape = 'u32[144,128]{1,0:T(1,128)}', space=vmem, size = 0x12000, scoped, tag = 'internal scratch']
  %s0 = inlined_call_operand.vmem [shape: f32[6,256], index: 0, kind: input, shape index: {}]
  %s1 = inlined_call_operand.vmem [shape: f32[6,1], index: 1, kind: input, shape index: {}]
  %s2 = inlined_call_operand.vmem [shape: f32[6,1], index: 2, kind: input, shape index: {}]
  %s3 = inlined_call_operand.hbm [shape: f32[6,256], index: 3, kind: output, shape index: {}]
  %s4 = sld [smem:[#allocation0]]
  $region22: #{tpu_custom_call.1} parent=0
    _
  %s6 = ssub.s32 1, %s4
  %s7 = scalar_select 0, %s6, %s4
  $region1: #{tpu_custom_call.1} parent=0
    #allocation2 [shape = 'u8[8192]{0}', space=vmem, size = 0x2000, scoped, tag = 'output window, operand 0, single buffered']
    #allocation3 [shape = 's32[1]{0}', space=sflag, size = 0x4, scoped, tag = 'scoped memory for tpu_custom_call.1']
    %8 = vsyncpa [#allocation3], 0
    // Predicated region
    $region2: #{tpu_custom_call.1} parent=1 // pred_check
      _
    $region3: #{tpu_custom_call.1} parent=1 // pred_check_branch
      %10 = sbr.rel (0) target = $region5
    $region4: #{tpu_custom_call.1} parent=1 // pred_region
      _
    $region5: #{tpu_custom_call.1} parent=1 // pred_fallthru
      _
    // Predicated region
    $region6: #{tpu_custom_call.1} parent=1 // pred_check
      _
    $region7: #{tpu_custom_call.1} parent=1 // pred_check_branch
      %12 = sbr.rel (0) target = $region9
    $region8: #{tpu_custom_call.1} parent=1 // pred_region
      _
    $region9: #{tpu_custom_call.1} parent=1 // pred_fallthru
      _
    // Predicated region
    $region10: #{tpu_custom_call.1} parent=1 // pred_check
      _
    $region11: #{tpu_custom_call.1} parent=1 // pred_check_branch
      %14 = sbr.rel (0) target = $region13
    $region12: #{tpu_custom_call.1} parent=1 // pred_region
      _
    $region13: #{tpu_custom_call.1} parent=1 // pred_fallthru
      _
    %v15 = vld [vmem:[%s0] sm:$0x3f]
    %v16 = vld [vmem:[%s0 + $0x8] sm:$0x3f]
    %v17 = vld [vmem:[%s1] sm:$0x3f]
    %19 = vset.pattern.permute.xlu0 0
    %20 = vperm.xlu0 %19, %v17
    %v21 = vpop.permute.xlu0 %20
    %v23 = vmul.f32 %v15, %v21
    %v24 = vmul.f32 %v16, %v21
    %v25 = vld [vmem:[%s2] sm:$0x3f]
    %27 = vset.pattern.permute.xlu0 0
    %28 = vperm.xlu0 %27, %v25
    %v29 = vpop.permute.xlu0 %28
    %v31 = vadd.f32 %v23, %v29
    %v32 = vadd.f32 %v24, %v29
    %33 = vst [vmem:[#allocation2] sm:$0x3f] %v31
    %34 = vst [vmem:[#allocation2 + $0x8] sm:$0x3f] %v32
    // Predicated region
    $region14: #{tpu_custom_call.1} parent=1 // pred_check
      _
    $region15: #{tpu_custom_call.1} parent=1 // pred_check_branch
      %36 = sbr.rel (0) target = $region17
    $region16: #{tpu_custom_call.1} parent=1 // pred_region
      %s38 = ssub.s32 256, 256
      %39 = vsyncadd [#allocation3], %s38
      %s41 = sshll.u32 [#allocation2], 4
      %s42 = int_to_ptr.vmem [resolvable:$true] %s41
      %44 = dma.vmem_to_hbm [thread:$0]  %s42, 256, %s3, [#allocation3]
    $region17: #{tpu_custom_call.1} parent=1 // pred_fallthru
      _
    // Predicated region
    $region18: #{tpu_custom_call.1} parent=1 // pred_check
      _
    $region19: #{tpu_custom_call.1} parent=1 // pred_check_branch
      %46 = sbr.rel (0) target = $region21
    $region20: #{tpu_custom_call.1} parent=1 // pred_region
      %47 = dma.done [#allocation3], 256
    $region21: #{tpu_custom_call.1} parent=1 // pred_fallthru
      _
    %48 = vsyncpa [#allocation3], 1

</llo_original>
